<compile_context>
chip_gen: v7x
topology: tpu7x:2x2x1
jax: 0.10.0
libtpu: 0.0.40
codegen_flags: <defaults>
</compile_context>

<pallas_src>
import functools

import jax
import jax.numpy as jnp
from jax.experimental import pallas as pl
from jax.experimental.pallas import tpu as pltpu


def _round_up(n, m):
    return ((n + m - 1) // m) * m


def ueca_kernel(x_ref,
                w1_ref, b1_ref,
                w2_ref, b2_ref,
                w3_ref, b3_ref,
                w4_ref, b4_ref,
                w5_ref, b5_ref,
                out_ref):
    # Activations go into the MXU as bf16 (weights are pre-cast bf16),
    # accumulation is f32; elementwise math stays f32 for v5e compatibility.
    h = x_ref[...].astype(jnp.bfloat16)

    h = jnp.dot(h, w1_ref[...], preferred_element_type=jnp.float32) + b1_ref[...]
    h = jnp.maximum(h, 0.0).astype(jnp.bfloat16)

    h = jnp.dot(h, w2_ref[...], preferred_element_type=jnp.float32) + b2_ref[...]
    h = jnp.maximum(h, 0.0).astype(jnp.bfloat16)

    h = jnp.dot(h, w3_ref[...], preferred_element_type=jnp.float32) + b3_ref[...]
    h = jnp.maximum(h, 0.0).astype(jnp.bfloat16)

    h = jnp.dot(h, w4_ref[...], preferred_element_type=jnp.float32) + b4_ref[...]
    h = jnp.maximum(h, 0.0).astype(jnp.bfloat16)

    logits = jnp.dot(h, w5_ref[...], preferred_element_type=jnp.float32) + b5_ref[...]

    # forward() drops the trailing nn.Sigmoid and applies sigmoid(logits * 5.0)
    out_ref[...] = jax.nn.sigmoid(logits * 5.0)


@functools.partial(jax.jit, static_argnames=("tile_b",))
def ueca_forward(x, params, tile_b=512):
    """x: (B, input_dim) f32; params: flat list [w1,b1,...,w5,b5],
    weights (in,out) f32, biases (1,out) f32."""
    B, in_dim = x.shape
    w1, b1, w2, b2, w3, b3, w4, b4, w5, b5 = params
    num_features = w5.shape[-1]

    # ---- host-side layout prep (cheap, fused by XLA) ----
    in_pad = _round_up(in_dim, 8)            # ragged K=13 -> aligned K=16
    out_pad = _round_up(num_features, 128)   # lane-dense output stores

    tile = _round_up(max(8, min(tile_b, _round_up(B, 8))), 8)
    b_pad = _round_up(B, tile)

    x_p = jnp.zeros((b_pad, in_pad), jnp.float32).at[:B, :in_dim].set(x)

    w1_p = (jnp.zeros((in_pad, w1.shape[1]), jnp.bfloat16)
            .at[:in_dim, :].set(w1.astype(jnp.bfloat16)))
    w5_p = (jnp.zeros((w5.shape[0], out_pad), jnp.bfloat16)
            .at[:, :num_features].set(w5.astype(jnp.bfloat16)))
    b5_p = jnp.zeros((1, out_pad), jnp.float32).at[:, :num_features].set(b5)

    weights = [w1_p, b1,
               w2.astype(jnp.bfloat16), b2,
               w3.astype(jnp.bfloat16), b3,
               w4.astype(jnp.bfloat16), b4,
               w5_p, b5_p]

    grid = (b_pad // tile,)

    resident = lambda i: (0, 0)   # weights/biases: same block every grid step
    in_specs = [pl.BlockSpec((tile, in_pad), lambda i: (i, 0))]
    in_specs += [pl.BlockSpec(w.shape, resident) for w in weights]

    flops = 2 * b_pad * (in_pad * 256 + 256 * 128 + 128 * 64 + 64 * 32
                         + 32 * out_pad)
    bytes_accessed = (b_pad * in_pad * 4 + b_pad * out_pad * 4
                      + sum(int(w.size) * w.dtype.itemsize for w in weights))

    out = pl.pallas_call(
        ueca_kernel,
        out_shape=jax.ShapeDtypeStruct((b_pad, out_pad), jnp.float32),
        grid_spec=pltpu.PrefetchScalarGridSpec(
            num_scalar_prefetch=0,
            grid=grid,
            in_specs=in_specs,
            out_specs=pl.BlockSpec((tile, out_pad), lambda i: (i, 0)),
        ),
        compiler_params=pltpu.CompilerParams(
            dimension_semantics=("parallel",),
        ),
        cost_estimate=pl.CostEstimate(
            flops=flops,
            transcendentals=b_pad * out_pad,
            bytes_accessed=bytes_accessed,
        ),
    )(x_p, *weights)

    return out[:B, :num_features]


def init_params(key, input_dim=13, num_features=10):
    """Deterministic synthetic parameters matching the PyTorch module shapes
    (weights stored as (in, out) so y = x @ W + b)."""
    dims = [input_dim, 256, 128, 64, 32, num_features]
    params = []
    for i in range(len(dims) - 1):
        key, kw, kb = jax.random.split(key, 3)
        bound = 1.0 / jnp.sqrt(dims[i])
        w = jax.random.uniform(kw, (dims[i], dims[i + 1]),
                               minval=-bound, maxval=bound, dtype=jnp.float32)
        b = jax.random.uniform(kb, (1, dims[i + 1]),
                               minval=-bound, maxval=bound, dtype=jnp.float32)
        params.extend([w, b])
    return params


def reference_forward(x, params):
    h = x
    for i in range(4):
        w, b = params[2 * i], params[2 * i + 1]
        h = jnp.maximum(h @ w + b, 0.0)
    logits = h @ params[8] + params[9]
    return jax.nn.sigmoid(logits * 5.0)


if __name__ == "__main__":
    key = jax.random.PRNGKey(0)
    kx, kp = jax.random.split(key)

    B, input_dim, num_features = 50, 13, 10   # small, non-multiple-of-8 batch
    x = jax.random.normal(kx, (B, input_dim), dtype=jnp.float32)
    params = init_params(kp, input_dim=input_dim, num_features=num_features)

    # small tile so the batch grid (and padding path) is actually exercised
    out = ueca_forward(x, params, tile_b=16)
    out = jax.block_until_ready(out)

    ref = reference_forward(x, params)
    assert out.shape == (B, num_features)
    # bf16 matmuls (f32 accumulation) vs f32 reference -> loose tolerance
    assert jnp.allclose(out, ref, atol=5e-2, rtol=1e-2), (
        f"mismatch vs reference, max abs err = {jnp.max(jnp.abs(out - ref))}")

    print("KERNEL_OK")
</pallas_src>

<mosaic_0001>
module attributes {stable_mosaic.version = 11 : i64} {
  func.func @ueca_kernel(%arg0: i32, %arg1: memref<16x16xf32, #tpu.memory_space<vmem>>, %arg2: memref<16x256xbf16, #tpu.memory_space<vmem>>, %arg3: memref<1x256xf32, #tpu.memory_space<vmem>>, %arg4: memref<256x128xbf16, #tpu.memory_space<vmem>>, %arg5: memref<1x128xf32, #tpu.memory_space<vmem>>, %arg6: memref<128x64xbf16, #tpu.memory_space<vmem>>, %arg7: memref<1x64xf32, #tpu.memory_space<vmem>>, %arg8: memref<64x32xbf16, #tpu.memory_space<vmem>>, %arg9: memref<1x32xf32, #tpu.memory_space<vmem>>, %arg10: memref<32x128xbf16, #tpu.memory_space<vmem>>, %arg11: memref<1x128xf32, #tpu.memory_space<vmem>>, %arg12: memref<16x128xf32, #tpu.memory_space<vmem>>) attributes {dimension_semantics = [#tpu.dimension_semantics<parallel>], iteration_bounds = array<i64: 4>, scalar_prefetch = 0 : i64, scratch_operands = 0 : i64, tpu.core_type = #tpu.core_type<tc>, window_params = [{transform_indices = @transform_0, window_bounds = array<i64: 16, 16>}, {pipeline_mode = #tpu.pipeline_mode<synchronous>, transform_indices = @transform_1, window_bounds = array<i64: 16, 256>}, {pipeline_mode = #tpu.pipeline_mode<synchronous>, transform_indices = @transform_2, window_bounds = array<i64: 1, 256>}, {pipeline_mode = #tpu.pipeline_mode<synchronous>, transform_indices = @transform_3, window_bounds = array<i64: 256, 128>}, {pipeline_mode = #tpu.pipeline_mode<synchronous>, transform_indices = @transform_4, window_bounds = array<i64: 1, 128>}, {pipeline_mode = #tpu.pipeline_mode<synchronous>, transform_indices = @transform_5, window_bounds = array<i64: 128, 64>}, {pipeline_mode = #tpu.pipeline_mode<synchronous>, transform_indices = @transform_6, window_bounds = array<i64: 1, 64>}, {pipeline_mode = #tpu.pipeline_mode<synchronous>, transform_indices = @transform_7, window_bounds = array<i64: 64, 32>}, {pipeline_mode = #tpu.pipeline_mode<synchronous>, transform_indices = @transform_8, window_bounds = array<i64: 1, 32>}, {pipeline_mode = #tpu.pipeline_mode<synchronous>, transform_indices = @transform_9, window_bounds = array<i64: 32, 128>}, {pipeline_mode = #tpu.pipeline_mode<synchronous>, transform_indices = @transform_10, window_bounds = array<i64: 1, 128>}, {transform_indices = @transform_11, window_bounds = array<i64: 16, 128>}]} {
    %c0 = arith.constant 0 : index
    %c0_0 = arith.constant 0 : index
    %0 = vector.load %arg1[%c0, %c0_0] : memref<16x16xf32, #tpu.memory_space<vmem>>, vector<16x16xf32>
    %1 = arith.truncf %0 : vector<16x16xf32> to vector<16x16xbf16>
    %c0_1 = arith.constant 0 : index
    %c0_2 = arith.constant 0 : index
    %2 = vector.load %arg2[%c0_1, %c0_2] : memref<16x256xbf16, #tpu.memory_space<vmem>>, vector<16x256xbf16>
    %cst = arith.constant dense<0.000000e+00> : vector<16x256xf32>
    %3 = tpu.matmul %1, %2, %cst {dimension_numbers = #tpu.dot_dimension_numbers<[1], [0], [0], [1], [0, 0, 1, 1], [], []>} : vector<16x16xbf16>, vector<16x256xbf16>, vector<16x256xf32> -> vector<16x256xf32>
    %c0_3 = arith.constant 0 : index
    %c0_4 = arith.constant 0 : index
    %4 = vector.load %arg3[%c0_3, %c0_4] : memref<1x256xf32, #tpu.memory_space<vmem>>, vector<1x256xf32>
    %5 = vector.broadcast %4 : vector<1x256xf32> to vector<16x256xf32>
    %6 = arith.addf %3, %5 : vector<16x256xf32>
    %cst_5 = arith.constant 0.000000e+00 : f32
    %7 = vector.broadcast %cst_5 : f32 to vector<16x256xf32>
    %8 = arith.maximumf %6, %7 : vector<16x256xf32>
    %9 = arith.truncf %8 : vector<16x256xf32> to vector<16x256xbf16>
    %c0_6 = arith.constant 0 : index
    %c0_7 = arith.constant 0 : index
    %10 = vector.load %arg4[%c0_6, %c0_7] : memref<256x128xbf16, #tpu.memory_space<vmem>>, vector<256x128xbf16>
    %cst_8 = arith.constant dense<0.000000e+00> : vector<16x128xf32>
    %11 = tpu.matmul %9, %10, %cst_8 {dimension_numbers = #tpu.dot_dimension_numbers<[1], [0], [0], [1], [0, 0, 1, 1], [], []>} : vector<16x256xbf16>, vector<256x128xbf16>, vector<16x128xf32> -> vector<16x128xf32>
    %c0_9 = arith.constant 0 : index
    %c0_10 = arith.constant 0 : index
    %12 = vector.load %arg5[%c0_9, %c0_10] : memref<1x128xf32, #tpu.memory_space<vmem>>, vector<1x128xf32>
    %13 = vector.broadcast %12 : vector<1x128xf32> to vector<16x128xf32>
    %14 = arith.addf %11, %13 : vector<16x128xf32>
    %cst_11 = arith.constant 0.000000e+00 : f32
    %15 = vector.broadcast %cst_11 : f32 to vector<16x128xf32>
    %16 = arith.maximumf %14, %15 : vector<16x128xf32>
    %17 = arith.truncf %16 : vector<16x128xf32> to vector<16x128xbf16>
    %c0_12 = arith.constant 0 : index
    %c0_13 = arith.constant 0 : index
    %18 = vector.load %arg6[%c0_12, %c0_13] : memref<128x64xbf16, #tpu.memory_space<vmem>>, vector<128x64xbf16>
    %cst_14 = arith.constant dense<0.000000e+00> : vector<16x64xf32>
    %19 = tpu.matmul %17, %18, %cst_14 {dimension_numbers = #tpu.dot_dimension_numbers<[1], [0], [0], [1], [0, 0, 1, 1], [], []>} : vector<16x128xbf16>, vector<128x64xbf16>, vector<16x64xf32> -> vector<16x64xf32>
    %c0_15 = arith.constant 0 : index
    %c0_16 = arith.constant 0 : index
    %20 = vector.load %arg7[%c0_15, %c0_16] : memref<1x64xf32, #tpu.memory_space<vmem>>, vector<1x64xf32>
    %21 = vector.broadcast %20 : vector<1x64xf32> to vector<16x64xf32>
    %22 = arith.addf %19, %21 : vector<16x64xf32>
    %cst_17 = arith.constant 0.000000e+00 : f32
    %23 = vector.broadcast %cst_17 : f32 to vector<16x64xf32>
    %24 = arith.maximumf %22, %23 : vector<16x64xf32>
    %25 = arith.truncf %24 : vector<16x64xf32> to vector<16x64xbf16>
    %c0_18 = arith.constant 0 : index
    %c0_19 = arith.constant 0 : index
    %26 = vector.load %arg8[%c0_18, %c0_19] : memref<64x32xbf16, #tpu.memory_space<vmem>>, vector<64x32xbf16>
    %cst_20 = arith.constant dense<0.000000e+00> : vector<16x32xf32>
    %27 = tpu.matmul %25, %26, %cst_20 {dimension_numbers = #tpu.dot_dimension_numbers<[1], [0], [0], [1], [0, 0, 1, 1], [], []>} : vector<16x64xbf16>, vector<64x32xbf16>, vector<16x32xf32> -> vector<16x32xf32>
    %c0_21 = arith.constant 0 : index
    %c0_22 = arith.constant 0 : index
    %28 = vector.load %arg9[%c0_21, %c0_22] : memref<1x32xf32, #tpu.memory_space<vmem>>, vector<1x32xf32>
    %29 = vector.broadcast %28 : vector<1x32xf32> to vector<16x32xf32>
    %30 = arith.addf %27, %29 : vector<16x32xf32>
    %cst_23 = arith.constant 0.000000e+00 : f32
    %31 = vector.broadcast %cst_23 : f32 to vector<16x32xf32>
    %32 = arith.maximumf %30, %31 : vector<16x32xf32>
    %33 = arith.truncf %32 : vector<16x32xf32> to vector<16x32xbf16>
    %c0_24 = arith.constant 0 : index
    %c0_25 = arith.constant 0 : index
    %34 = vector.load %arg10[%c0_24, %c0_25] : memref<32x128xbf16, #tpu.memory_space<vmem>>, vector<32x128xbf16>
    %cst_26 = arith.constant dense<0.000000e+00> : vector<16x128xf32>
    %35 = tpu.matmul %33, %34, %cst_26 {dimension_numbers = #tpu.dot_dimension_numbers<[1], [0], [0], [1], [0, 0, 1, 1], [], []>} : vector<16x32xbf16>, vector<32x128xbf16>, vector<16x128xf32> -> vector<16x128xf32>
    %c0_27 = arith.constant 0 : index
    %c0_28 = arith.constant 0 : index
    %36 = vector.load %arg11[%c0_27, %c0_28] : memref<1x128xf32, #tpu.memory_space<vmem>>, vector<1x128xf32>
    %37 = vector.broadcast %36 : vector<1x128xf32> to vector<16x128xf32>
    %38 = arith.addf %35, %37 : vector<16x128xf32>
    %cst_29 = arith.constant 5.000000e+00 : f32
    %39 = vector.broadcast %cst_29 : f32 to vector<16x128xf32>
    %40 = arith.mulf %38, %39 : vector<16x128xf32>
    %41 = arith.negf %40 : vector<16x128xf32>
    %42 = math.exp %41 : vector<16x128xf32>
    %cst_30 = arith.constant 1.000000e+00 : f32
    %43 = vector.broadcast %cst_30 : f32 to vector<16x128xf32>
    %44 = arith.addf %43, %42 : vector<16x128xf32>
    %45 = arith.divf %43, %44 : vector<16x128xf32>
    %c0_31 = arith.constant 0 : index
    %c0_32 = arith.constant 0 : index
    %46 = vector.load %arg12[%c0_31, %c0_32] : memref<16x128xf32, #tpu.memory_space<vmem>>, vector<16x128xf32>
    tpu.vector_store %arg12[%c0_31, %c0_32], %45 {strides = array<i32>} : memref<16x128xf32, #tpu.memory_space<vmem>>, vector<16x128xf32>,
    return
  }
  func.func @transform_0(%arg0: i32) -> (i32, i32) {
    %c0_i32 = arith.constant 0 : i32
    %c0_i32_0 = arith.constant 0 : i32
    return %arg0, %c0_i32 : i32, i32
  }
  func.func @transform_1(%arg0: i32) -> (i32, i32) {
    %c0_i32 = arith.constant 0 : i32
    %c0_i32_0 = arith.constant 0 : i32
    %c0_i32_1 = arith.constant 0 : i32
    return %c0_i32, %c0_i32_0 : i32, i32
  }
  func.func @transform_2(%arg0: i32) -> (i32, i32) {
    %c0_i32 = arith.constant 0 : i32
    %c0_i32_0 = arith.constant 0 : i32
    %c0_i32_1 = arith.constant 0 : i32
    return %c0_i32, %c0_i32_0 : i32, i32
  }
  func.func @transform_3(%arg0: i32) -> (i32, i32) {
    %c0_i32 = arith.constant 0 : i32
    %c0_i32_0 = arith.constant 0 : i32
    %c0_i32_1 = arith.constant 0 : i32
    return %c0_i32, %c0_i32_0 : i32, i32
  }
  func.func @transform_4(%arg0: i32) -> (i32, i32) {
    %c0_i32 = arith.constant 0 : i32
    %c0_i32_0 = arith.constant 0 : i32
    %c0_i32_1 = arith.constant 0 : i32
    return %c0_i32, %c0_i32_0 : i32, i32
  }
  func.func @transform_5(%arg0: i32) -> (i32, i32) {
    %c0_i32 = arith.constant 0 : i32
    %c0_i32_0 = arith.constant 0 : i32
    %c0_i32_1 = arith.constant 0 : i32
    return %c0_i32, %c0_i32_0 : i32, i32
  }
  func.func @transform_6(%arg0: i32) -> (i32, i32) {
    %c0_i32 = arith.constant 0 : i32
    %c0_i32_0 = arith.constant 0 : i32
    %c0_i32_1 = arith.constant 0 : i32
    return %c0_i32, %c0_i32_0 : i32, i32
  }
  func.func @transform_7(%arg0: i32) -> (i32, i32) {
    %c0_i32 = arith.constant 0 : i32
    %c0_i32_0 = arith.constant 0 : i32
    %c0_i32_1 = arith.constant 0 : i32
    return %c0_i32, %c0_i32_0 : i32, i32
  }
  func.func @transform_8(%arg0: i32) -> (i32, i32) {
    %c0_i32 = arith.constant 0 : i32
    %c0_i32_0 = arith.constant 0 : i32
    %c0_i32_1 = arith.constant 0 : i32
    return %c0_i32, %c0_i32_0 : i32, i32
  }
  func.func @transform_9(%arg0: i32) -> (i32, i32) {
    %c0_i32 = arith.constant 0 : i32
    %c0_i32_0 = arith.constant 0 : i32
    %c0_i32_1 = arith.constant 0 : i32
    return %c0_i32, %c0_i32_0 : i32, i32
  }
  func.func @transform_10(%arg0: i32) -> (i32, i32) {
    %c0_i32 = arith.constant 0 : i32
    %c0_i32_0 = arith.constant 0 : i32
    %c0_i32_1 = arith.constant 0 : i32
    return %c0_i32, %c0_i32_0 : i32, i32
  }
  func.func @transform_11(%arg0: i32) -> (i32, i32) {
    %c0_i32 = arith.constant 0 : i32
    %c0_i32_0 = arith.constant 0 : i32
    return %arg0, %c0_i32 : i32, i32
  }
}

</mosaic_0001>

<llo_original>
// kernel: ueca_forward.1
$region0: #{ueca_forward.1}
  #allocation0 [shape = 'u32[]', space=smem, size = 0x4, offset = 0x4, fixed_abs, tag = 'smem constant byte address 0x4 - core index']
  #allocation1 [shape = 'u32[144,128]{1,0:T(1,128)}', space=vmem, size = 0x12000, scoped, tag = 'internal scratch']
  %s0 = inlined_call_operand.vmem [shape: f32[64,16], index: 0, kind: input, shape index: {}]
  %s1 = inlined_call_operand.vmem [shape: bf16[16,256], index: 1, kind: input, shape index: {}]
  %s2 = inlined_call_operand.vmem [shape: f32[1,256], index: 2, kind: input, shape index: {}]
  %s3 = inlined_call_operand.vmem [shape: bf16[256,128], index: 3, kind: input, shape index: {}]
  %s4 = inlined_call_operand.vmem [shape: f32[1,128], index: 4, kind: input, shape index: {}]
  %s5 = inlined_call_operand.vmem [shape: bf16[128,64], index: 5, kind: input, shape index: {}]
  %s6 = inlined_call_operand.vmem [shape: f32[1,64], index: 6, kind: input, shape index: {}]
  %s7 = inlined_call_operand.vmem [shape: bf16[64,32], index: 7, kind: input, shape index: {}]
  %s8 = inlined_call_operand.vmem [shape: f32[1,32], index: 8, kind: input, shape index: {}]
  %s9 = inlined_call_operand.vmem [shape: bf16[32,128], index: 9, kind: input, shape index: {}]
  %s10 = inlined_call_operand.vmem [shape: f32[1,128], index: 10, kind: input, shape index: {}]
  %s11 = inlined_call_operand.vmem [shape: f32[64,128], index: 11, kind: output, shape index: {}]
  %s12 = sld [smem:[#allocation0]]
  $region77: #{ueca_forward.1} parent=0
    _
  %s14 = ssub.s32 1, %s12
  %s15 = scalar_select 0, %s14, %s12
  loop: start=0, step=1, limit=6
  $region2: #{ueca_forward.1} parent=0 // loop_pre_header
    _
  $region3: #{ueca_forward.1} parent=0 // loop_header
    %s17 = sphi 0, %s21
    %p18 = scmp.ge.s32.totalorder %s17, 6
    %s27 = sphi 0, %s29
    %s30 = sphi 0, %s27
    %s31 = sphi 0, %s30
    %s47 = sphi 0, %s31
    %s51 = sphi 0, %s51
    %s53 = sphi 0, %s51
    %s54 = sphi 0, %s53
    %s68 = sphi 0, %s54
    %s72 = sphi 0, %s72
    %s74 = sphi 0, %s72
    %s75 = sphi 0, %s74
    %s89 = sphi 0, %s75
    %s93 = sphi 0, %s93
    %s95 = sphi 0, %s93
    %s96 = sphi 0, %s95
    %s110 = sphi 0, %s96
    %s114 = sphi 0, %s114
    %s116 = sphi 0, %s114
    %s117 = sphi 0, %s116
    %s131 = sphi 0, %s117
    %s135 = sphi 0, %s135
    %s137 = sphi 0, %s135
    %s138 = sphi 0, %s137
    %s152 = sphi 0, %s138
    %s156 = sphi 0, %s156
    %s158 = sphi 0, %s156
    %s159 = sphi 0, %s158
    %s173 = sphi 0, %s159
    %s177 = sphi 0, %s177
    %s179 = sphi 0, %s177
    %s180 = sphi 0, %s179
    %s194 = sphi 0, %s180
    %s198 = sphi 0, %s198
    %s200 = sphi 0, %s198
    %s201 = sphi 0, %s200
    %s215 = sphi 0, %s201
    %s219 = sphi 0, %s219
    %s221 = sphi 0, %s219
    %s222 = sphi 0, %s221
    %s236 = sphi 0, %s222
    %s240 = sphi 0, %s240
    %s242 = sphi 0, %s240
    %s243 = sphi 0, %s242
    %s257 = sphi 0, %s243
    %s263 = sphi 0, %s265
    %s266 = sphi 0, %s263
    %s267 = sphi 0, %s266
    %s283 = sphi 0, %s267
  $region4: #{ueca_forward.1} parent=0 // loop_header_branch
    %20 = sbr.rel (%p18) target = $region8
  $region5: #{ueca_forward.1} parent=0 // loop_body
    %s22 = ssub.s32 %s17, 1
    %s23 = ssub.s32 %s17, 2
    %s24 = sadd.s32 %s17, 1
    %s25 = ssub.s32 %s17, %s24
    %p26 = scmp.eq.s32.totalorder %s25, 0
    %s28 = sadd.s32 %s27, 1
    %s29 = scalar_select %p26, %s27, %s28
    %p32 = pneg %p26
    %p33 = scmp.eq.s32.totalorder %s17, 3
    %p34 = por %p32, %p33
    %p35 = scmp.ne.s32.totalorder %s27, %s30
    %p36 = scmp.eq.s32.totalorder %s17, 0
    %p37 = por %p35, %p36
    %p38 = scmp.ne.s32.totalorder %s27, %s30
    %p39 = scmp.eq.s32.totalorder %s22, 3
    %p40 = por %p38, %p39
    %p41 = scmp.ne.s32.totalorder %s30, %s31
    %p42 = scmp.eq.s32.totalorder %s22, 0
    %p43 = por %p41, %p42
    %p44 = scmp.ne.s32.totalorder %s30, %s31
    %p45 = scmp.eq.s32.totalorder %s23, 3
    %p46 = por %p44, %p45
    %p48 = scmp.ne.s32.totalorder %s31, %s47
    %p49 = scmp.eq.s32.totalorder %s23, 0
    %p50 = por %p48, %p49
    %s52 = sadd.s32 %s51, 1
    %p55 = scmp.eq.s32.totalorder %s17, 3
    %p56 = scmp.ne.s32.totalorder %s51, %s53
    %p57 = scmp.eq.s32.totalorder %s17, 0
    %p58 = por %p56, %p57
    %p59 = scmp.ne.s32.totalorder %s51, %s53
    %p60 = scmp.eq.s32.totalorder %s22, 3
    %p61 = por %p59, %p60
    %p62 = scmp.ne.s32.totalorder %s53, %s54
    %p63 = scmp.eq.s32.totalorder %s22, 0
    %p64 = por %p62, %p63
    %p65 = scmp.ne.s32.totalorder %s53, %s54
    %p66 = scmp.eq.s32.totalorder %s23, 3
    %p67 = por %p65, %p66
    %p69 = scmp.ne.s32.totalorder %s54, %s68
    %p70 = scmp.eq.s32.totalorder %s23, 0
    %p71 = por %p69, %p70
    %s73 = sadd.s32 %s72, 1
    %p76 = scmp.eq.s32.totalorder %s17, 3
    %p77 = scmp.ne.s32.totalorder %s72, %s74
    %p78 = scmp.eq.s32.totalorder %s17, 0
    %p79 = por %p77, %p78
    %p80 = scmp.ne.s32.totalorder %s72, %s74
    %p81 = scmp.eq.s32.totalorder %s22, 3
    %p82 = por %p80, %p81
    %p83 = scmp.ne.s32.totalorder %s74, %s75
    %p84 = scmp.eq.s32.totalorder %s22, 0
    %p85 = por %p83, %p84
    %p86 = scmp.ne.s32.totalorder %s74, %s75
    %p87 = scmp.eq.s32.totalorder %s23, 3
    %p88 = por %p86, %p87
    %p90 = scmp.ne.s32.totalorder %s75, %s89
    %p91 = scmp.eq.s32.totalorder %s23, 0
    %p92 = por %p90, %p91
    %s94 = sadd.s32 %s93, 1
    %p97 = scmp.eq.s32.totalorder %s17, 3
    %p98 = scmp.ne.s32.totalorder %s93, %s95
    %p99 = scmp.eq.s32.totalorder %s17, 0
    %p100 = por %p98, %p99
    %p101 = scmp.ne.s32.totalorder %s93, %s95
    %p102 = scmp.eq.s32.totalorder %s22, 3
    %p103 = por %p101, %p102
    %p104 = scmp.ne.s32.totalorder %s95, %s96
    %p105 = scmp.eq.s32.totalorder %s22, 0
    %p106 = por %p104, %p105
    %p107 = scmp.ne.s32.totalorder %s95, %s96
    %p108 = scmp.eq.s32.totalorder %s23, 3
    %p109 = por %p107, %p108
    %p111 = scmp.ne.s32.totalorder %s96, %s110
    %p112 = scmp.eq.s32.totalorder %s23, 0
    %p113 = por %p111, %p112
    %s115 = sadd.s32 %s114, 1
    %p118 = scmp.eq.s32.totalorder %s17, 3
    %p119 = scmp.ne.s32.totalorder %s114, %s116
    %p120 = scmp.eq.s32.totalorder %s17, 0
    %p121 = por %p119, %p120
    %p122 = scmp.ne.s32.totalorder %s114, %s116
    %p123 = scmp.eq.s32.totalorder %s22, 3
    %p124 = por %p122, %p123
    %p125 = scmp.ne.s32.totalorder %s116, %s117
    %p126 = scmp.eq.s32.totalorder %s22, 0
    %p127 = por %p125, %p126
    %p128 = scmp.ne.s32.totalorder %s116, %s117
    %p129 = scmp.eq.s32.totalorder %s23, 3
    %p130 = por %p128, %p129
    %p132 = scmp.ne.s32.totalorder %s117, %s131
    %p133 = scmp.eq.s32.totalorder %s23, 0
    %p134 = por %p132, %p133
    %s136 = sadd.s32 %s135, 1
    %p139 = scmp.eq.s32.totalorder %s17, 3
    %p140 = scmp.ne.s32.totalorder %s135, %s137
    %p141 = scmp.eq.s32.totalorder %s17, 0
    %p142 = por %p140, %p141
    %p143 = scmp.ne.s32.totalorder %s135, %s137
    %p144 = scmp.eq.s32.totalorder %s22, 3
    %p145 = por %p143, %p144
    %p146 = scmp.ne.s32.totalorder %s137, %s138
    %p147 = scmp.eq.s32.totalorder %s22, 0
    %p148 = por %p146, %p147
    %p149 = scmp.ne.s32.totalorder %s137, %s138
    %p150 = scmp.eq.s32.totalorder %s23, 3
    %p151 = por %p149, %p150
    %p153 = scmp.ne.s32.totalorder %s138, %s152
    %p154 = scmp.eq.s32.totalorder %s23, 0
    %p155 = por %p153, %p154
    %s157 = sadd.s32 %s156, 1
    %p160 = scmp.eq.s32.totalorder %s17, 3
    %p161 = scmp.ne.s32.totalorder %s156, %s158
    %p162 = scmp.eq.s32.totalorder %s17, 0
    %p163 = por %p161, %p162
    %p164 = scmp.ne.s32.totalorder %s156, %s158
    %p165 = scmp.eq.s32.totalorder %s22, 3
    %p166 = por %p164, %p165
    %p167 = scmp.ne.s32.totalorder %s158, %s159
    %p168 = scmp.eq.s32.totalorder %s22, 0
    %p169 = por %p167, %p168
    %p170 = scmp.ne.s32.totalorder %s158, %s159
    %p171 = scmp.eq.s32.totalorder %s23, 3
    %p172 = por %p170, %p171
    %p174 = scmp.ne.s32.totalorder %s159, %s173
    %p175 = scmp.eq.s32.totalorder %s23, 0
    %p176 = por %p174, %p175
    %s178 = sadd.s32 %s177, 1
    %p181 = scmp.eq.s32.totalorder %s17, 3
    %p182 = scmp.ne.s32.totalorder %s177, %s179
    %p183 = scmp.eq.s32.totalorder %s17, 0
    %p184 = por %p182, %p183
    %p185 = scmp.ne.s32.totalorder %s177, %s179
    %p186 = scmp.eq.s32.totalorder %s22, 3
    %p187 = por %p185, %p186
    %p188 = scmp.ne.s32.totalorder %s179, %s180
    %p189 = scmp.eq.s32.totalorder %s22, 0
    %p190 = por %p188, %p189
    %p191 = scmp.ne.s32.totalorder %s179, %s180
    %p192 = scmp.eq.s32.totalorder %s23, 3
    %p193 = por %p191, %p192
    %p195 = scmp.ne.s32.totalorder %s180, %s194
    %p196 = scmp.eq.s32.totalorder %s23, 0
    %p197 = por %p195, %p196
    %s199 = sadd.s32 %s198, 1
    %p202 = scmp.eq.s32.totalorder %s17, 3
    %p203 = scmp.ne.s32.totalorder %s198, %s200
    %p204 = scmp.eq.s32.totalorder %s17, 0
    %p205 = por %p203, %p204
    %p206 = scmp.ne.s32.totalorder %s198, %s200
    %p207 = scmp.eq.s32.totalorder %s22, 3
    %p208 = por %p206, %p207
    %p209 = scmp.ne.s32.totalorder %s200, %s201
    %p210 = scmp.eq.s32.totalorder %s22, 0
    %p211 = por %p209, %p210
    %p212 = scmp.ne.s32.totalorder %s200, %s201
    %p213 = scmp.eq.s32.totalorder %s23, 3
    %p214 = por %p212, %p213
    %p216 = scmp.ne.s32.totalorder %s201, %s215
    %p217 = scmp.eq.s32.totalorder %s23, 0
    %p218 = por %p216, %p217
    %s220 = sadd.s32 %s219, 1
    %p223 = scmp.eq.s32.totalorder %s17, 3
    %p224 = scmp.ne.s32.totalorder %s219, %s221
    %p225 = scmp.eq.s32.totalorder %s17, 0
    %p226 = por %p224, %p225
    %p227 = scmp.ne.s32.totalorder %s219, %s221
    %p228 = scmp.eq.s32.totalorder %s22, 3
    %p229 = por %p227, %p228
    %p230 = scmp.ne.s32.totalorder %s221, %s222
    %p231 = scmp.eq.s32.totalorder %s22, 0
    %p232 = por %p230, %p231
    %p233 = scmp.ne.s32.totalorder %s221, %s222
    %p234 = scmp.eq.s32.totalorder %s23, 3
    %p235 = por %p233, %p234
    %p237 = scmp.ne.s32.totalorder %s222, %s236
    %p238 = scmp.eq.s32.totalorder %s23, 0
    %p239 = por %p237, %p238
    %s241 = sadd.s32 %s240, 1
    %p244 = scmp.eq.s32.totalorder %s17, 3
    %p245 = scmp.ne.s32.totalorder %s240, %s242
    %p246 = scmp.eq.s32.totalorder %s17, 0
    %p247 = por %p245, %p246
    %p248 = scmp.ne.s32.totalorder %s240, %s242
    %p249 = scmp.eq.s32.totalorder %s22, 3
    %p250 = por %p248, %p249
    %p251 = scmp.ne.s32.totalorder %s242, %s243
    %p252 = scmp.eq.s32.totalorder %s22, 0
    %p253 = por %p251, %p252
    %p254 = scmp.ne.s32.totalorder %s242, %s243
    %p255 = scmp.eq.s32.totalorder %s23, 3
    %p256 = por %p254, %p255
    %p258 = scmp.ne.s32.totalorder %s243, %s257
    %p259 = scmp.eq.s32.totalorder %s23, 0
    %p260 = por %p258, %p259
    %s261 = ssub.s32 %s17, %s24
    %p262 = scmp.eq.s32.totalorder %s261, 0
    %s264 = sadd.s32 %s263, 1
    %s265 = scalar_select %p262, %s263, %s264
    %p268 = pneg %p262
    %p269 = scmp.eq.s32.totalorder %s17, 3
    %p270 = por %p268, %p269
    %p271 = scmp.ne.s32.totalorder %s263, %s266
    %p272 = scmp.eq.s32.totalorder %s17, 0
    %p273 = por %p271, %p272
    %p274 = scmp.ne.s32.totalorder %s263, %s266
    %p275 = scmp.eq.s32.totalorder %s22, 3
    %p276 = por %p274, %p275
    %p277 = scmp.ne.s32.totalorder %s266, %s267
    %p278 = scmp.eq.s32.totalorder %s22, 0
    %p279 = por %p277, %p278
    %p280 = scmp.ne.s32.totalorder %s266, %s267
    %p281 = scmp.eq.s32.totalorder %s23, 3
    %p282 = por %p280, %p281
    %p284 = scmp.ne.s32.totalorder %s267, %s283
    %p285 = scmp.eq.s32.totalorder %s23, 0
    %p286 = por %p284, %p285
    %p287 = scmp.le.s32.totalorder 1, %s17
    %p288 = scmp.lt.s32.totalorder %s17, 5
    %p289 = pnand %p287, %p288
    %p290 = pneg %p289
    // Predicated region
    $region9: #{ueca_forward.1} parent=5 // pred_check
      _
    $region10: #{ueca_forward.1} parent=5 // pred_check_branch
      %292 = sbr.rel (%p289) target = $region12
    $region11: #{ueca_forward.1} parent=5 // pred_region
      %s293 = ssub.s32 %s17, 1
      // Predicated region
      $region13: #{ueca_forward.1} parent=11 // pred_check
        %p294 = pneg %p64
      $region14: #{ueca_forward.1} parent=11 // pred_check_branch
        %296 = sbr.rel (%p294) target = $region16
      $region15: #{ueca_forward.1} parent=11 // pred_region
        _
      $region16: #{ueca_forward.1} parent=11 // pred_fallthru
        _
      // Predicated region
      $region17: #{ueca_forward.1} parent=11 // pred_check
        %p297 = pneg %p85
      $region18: #{ueca_forward.1} parent=11 // pred_check_branch
        %299 = sbr.rel (%p297) target = $region20
      $region19: #{ueca_forward.1} parent=11 // pred_region
        _
      $region20: #{ueca_forward.1} parent=11 // pred_fallthru
        _
      // Predicated region
      $region21: #{ueca_forward.1} parent=11 // pred_check
        %p300 = pneg %p106
      $region22: #{ueca_forward.1} parent=11 // pred_check_branch
        %302 = sbr.rel (%p300) target = $region24
      $region23: #{ueca_forward.1} parent=11 // pred_region
        _
      $region24: #{ueca_forward.1} parent=11 // pred_fallthru
        _
      // Predicated region
      $region25: #{ueca_forward.1} parent=11 // pred_check
        %p303 = pneg %p127
      $region26: #{ueca_forward.1} parent=11 // pred_check_branch
        %305 = sbr.rel (%p303) target = $region28
      $region27: #{ueca_forward.1} parent=11 // pred_region
        _
      $region28: #{ueca_forward.1} parent=11 // pred_fallthru
        _
      // Predicated region
      $region29: #{ueca_forward.1} parent=11 // pred_check
        %p306 = pneg %p148
      $region30: #{ueca_forward.1} parent=11 // pred_check_branch
        %308 = sbr.rel (%p306) target = $region32
      $region31: #{ueca_forward.1} parent=11 // pred_region
        _
      $region32: #{ueca_forward.1} parent=11 // pred_fallthru
        _
      // Predicated region
      $region33: #{ueca_forward.1} parent=11 // pred_check
        %p309 = pneg %p169
      $region34: #{ueca_forward.1} parent=11 // pred_check_branch
        %311 = sbr.rel (%p309) target = $region36
      $region35: #{ueca_forward.1} parent=11 // pred_region
        _
      $region36: #{ueca_forward.1} parent=11 // pred_fallthru
        _
      // Predicated region
      $region37: #{ueca_forward.1} parent=11 // pred_check
        %p312 = pneg %p190
      $region38: #{ueca_forward.1} parent=11 // pred_check_branch
        %314 = sbr.rel (%p312) target = $region40
      $region39: #{ueca_forward.1} parent=11 // pred_region
        _
      $region40: #{ueca_forward.1} parent=11 // pred_fallthru
        _
      // Predicated region
      $region41: #{ueca_forward.1} parent=11 // pred_check
        %p315 = pneg %p211
      $region42: #{ueca_forward.1} parent=11 // pred_check_branch
        %317 = sbr.rel (%p315) target = $region44
      $region43: #{ueca_forward.1} parent=11 // pred_region
        _
      $region44: #{ueca_forward.1} parent=11 // pred_fallthru
        _
      // Predicated region
      $region45: #{ueca_forward.1} parent=11 // pred_check
        %p318 = pneg %p232
      $region46: #{ueca_forward.1} parent=11 // pred_check_branch
        %320 = sbr.rel (%p318) target = $region48
      $region47: #{ueca_forward.1} parent=11 // pred_region
        _
      $region48: #{ueca_forward.1} parent=11 // pred_fallthru
        _
      // Predicated region
      $region49: #{ueca_forward.1} parent=11 // pred_check
        %p321 = pneg %p253
      $region50: #{ueca_forward.1} parent=11 // pred_check_branch
        %323 = sbr.rel (%p321) target = $region52
      $region51: #{ueca_forward.1} parent=11 // pred_region
        _
      $region52: #{ueca_forward.1} parent=11 // pred_fallthru
        _
    $region12: #{ueca_forward.1} parent=5 // pred_fallthru
      _
    %p324 = scmp.lt.s32.totalorder %s17, 4
    // Predicated region
    $region53: #{ueca_forward.1} parent=5 // pred_check
      %p325 = pneg %p324
    $region54: #{ueca_forward.1} parent=5 // pred_check_branch
      %327 = sbr.rel (%p325) target = $region56
    $region55: #{ueca_forward.1} parent=5 // pred_region
      // Predicated region
      $region57: #{ueca_forward.1} parent=55 // pred_check
        %p328 = pneg %p37
      $region58: #{ueca_forward.1} parent=55 // pred_check_branch
        %330 = sbr.rel (%p328) target = $region60
      $region59: #{ueca_forward.1} parent=55 // pred_region
        %s331 = smul.u32 2, %s17
        %p332 = scmp.lt.s32.totalorder %s331, 7
        %s333 = scalar_select %p332, %s331, 7
        %s334 = smul.addr %s333, 8
        %s335 = scalar_lea.vmem %s0, %s334
        %s336 = smul.u32 2, %s17
      $region60: #{ueca_forward.1} parent=55 // pred_fallthru
        _
    $region56: #{ueca_forward.1} parent=5 // pred_fallthru
      _
    %p337 = scmp.le.s32.totalorder 1, %s17
    %p338 = scmp.lt.s32.totalorder %s17, 5
    %p339 = pnand %p337, %p338
    %p340 = pneg %p339
    // Predicated region
    $region61: #{ueca_forward.1} parent=5 // pred_check
      _
    $region62: #{ueca_forward.1} parent=5 // pred_check_branch
      %342 = sbr.rel (%p339) target = $region64
    $region63: #{ueca_forward.1} parent=5 // pred_region
      %s343 = ssub.s32 %s17, 1
      %s344 = smul.u32 2, %s22
      %p345 = scmp.lt.s32.totalorder %s344, 7
      %s346 = scalar_select %p345, %s344, 7
      %s347 = smul.addr %s346, 8
      %s348 = scalar_lea.vmem %s0, %s347
      %p349 = pneg %p43
      %p350 = pneg %p40
      %p351 = pneg %p64
      %p352 = pneg %p61
      %p353 = pneg %p85
      %p354 = pneg %p82
      %p355 = pneg %p106
      %p356 = pneg %p103
      %p357 = pneg %p127
      %p358 = pneg %p124
      %p359 = pneg %p148
      %p360 = pneg %p145
      %p361 = pneg %p169
      %p362 = pneg %p166
      %p363 = pneg %p190
      %p364 = pneg %p187
      %p365 = pneg %p211
      %p366 = pneg %p208
      %p367 = pneg %p232
      %p368 = pneg %p229
      %p369 = pneg %p253
      %p370 = pneg %p250
      %p371 = pneg %p279
      %p372 = pneg %p276
      %s373 = smul.u32 2, %s22
      %p374 = scmp.lt.s32.totalorder %s373, 7
      %s375 = scalar_select %p374, %s373, 7
      %s376 = smul.addr %s375, 8
      %s377 = scalar_lea.vmem %s11, %s376
      %s378 = smul.u32 2, %s22
      %p379 = scmp.lt.s32.totalorder %s378, 7
      %s380 = scalar_select %p379, %s378, 7
      %s381 = smul.addr %s380, 8
      %s382 = scalar_lea.vmem %s0, %s381
      %s383 = smul.u32 2, %s22
      %s384 = smul.u32 2, %s22
      %p385 = scmp.lt.s32.totalorder %s384, 7
      %s386 = scalar_select %p385, %s384, 7
      %s387 = smul.addr %s386, 8
      %s388 = scalar_lea.vmem %s11, %s387
      %s389 = smul.u32 2, %s22
      %v391 = vld [vmem:[%s382] sm:$0xff]
      %v392 = vld [vmem:[%s382 + $0x8] sm:$0xff]
      %v393 = vpack.c.bf16 %v392, %v391
      %v394 = vld [vmem:[%s1] sm:$0xff]
      %v395 = vld [vmem:[%s1 + $0x8] sm:$0xff]
      %v396 = vld [vmem:[%s2] sm:$0x3]
      %v398 = vlaneseq
      %v399 = vshrl.u32 %v398, 7
      %v400 = vsub.s32 0, %v399
      %v401 = vrot.slane %v396, %v400
      %v402 = vlaneseq
      %v403 = vshrl.u32 %v402, 7
      %v404 = vsub.s32 1, %v403
      %v405 = vrot.slane %v396, %v404
      %v410 = vunpack.c.l.b16 %v394
      %v411 = vunpack.c.h.b16 %v394
      %v412 = vunpack.c.l.b16 %v395
      %v413 = vunpack.c.h.b16 %v395
      %v414 = vpack.c.b16 %v412, %v410
      %v415 = vpack.c.b16 %v413, %v411
      %vm418 = vcmask 130048
      %v420 = vsel %vm418, %v393, 0
      %422 = vmatprep.subr.bf16.mxu0 %v415
      %423 = vmatpush1.bf16.msra.mxu0 %v414
      %424 = vmatprep.subr.bf16.mxu0 0
      %425 = vmatpush1.bf16.msra.mxu0 0
      %426 = vmatprep.subr.bf16.mxu0 0
      %427 = vmatpush1.bf16.msra.mxu0 0
      %428 = vmatprep.subr.bf16.mxu0 0
      %429 = vmatpush1.bf16.msra.mxu0 0
      %430 = vmatprep.subr.bf16.mxu0 0
      %431 = vmatpush1.bf16.msra.mxu0 0
      %432 = vmatprep.subr.bf16.mxu0 0
      %433 = vmatpush1.bf16.msra.mxu0 0
      %434 = vmatprep.subr.bf16.mxu0 0
      %435 = vmatpush1.bf16.msra.mxu0 0
      %436 = vmatprep.subr.bf16.mxu0 0
      %437 = vmatpush1.bf16.msra.mxu0 0
      %438 = vmatprep.subr.bf16.mxu0 0
      %439 = vmatpush1.bf16.msra.mxu0 0
      %440 = vmatprep.subr.bf16.mxu0 0
      %441 = vmatpush1.bf16.msra.mxu0 0
      %442 = vmatprep.subr.bf16.mxu0 0
      %443 = vmatpush1.bf16.msra.mxu0 0
      %444 = vmatprep.subr.bf16.mxu0 0
      %445 = vmatpush1.bf16.msra.mxu0 0
      %446 = vmatprep.subr.bf16.mxu0 0
      %447 = vmatpush1.bf16.msra.mxu0 0
      %448 = vmatprep.subr.bf16.mxu0 0
      %449 = vmatpush1.bf16.msra.mxu0 0
      %450 = vmatprep.subr.bf16.mxu0 0
      %451 = vmatpush1.bf16.msra.mxu0 0
      %452 = vmatprep.subr.bf16.mxu0 0
      %453 = vmatpush1.bf16.msra.mxu0 0
      %454 = vmatprep.mubr.bf16.mxu0 0
      %455 = vmatmul.mubr.bf16.gmra.mrb[0].mxu0 %v420
      %v456 = vpop.f32.mrb[0].mxu0
      %v457 = vadd.f32 %v401, %v456
      %v458 = vpop.f32.mrb[0].mxu0
      %v459 = vadd.f32 %v405, %v458
      %v460 = vpop.f32.mrb[0].mxu0
      %v461 = vadd.f32 %v401, %v460
      %v462 = vpop.f32.mrb[0].mxu0
      %v463 = vadd.f32 %v405, %v462
      %464 = vdwg.mxu0
      %v465 = vmax.f32 %v457, 0.0
      %v466 = vmax.f32 %v459, 0.0
      %v467 = vmax.f32 %v461, 0.0
      %v468 = vmax.f32 %v463, 0.0
      %v469 = vpack.c.bf16 %v467, %v465
      %v470 = vpack.c.bf16 %v468, %v466
      %v471 = vld [vmem:[%s3] sm:$0xf]
      %v472 = vld [vmem:[%s3 + $0x4] sm:$0xf]
      %v473 = vld [vmem:[%s3 + $0x8] sm:$0xf]
      %v474 = vld [vmem:[%s3 + $0xc] sm:$0xf]
      %v475 = vld [vmem:[%s3 + $0x10] sm:$0xf]
      %v476 = vld [vmem:[%s3 + $0x14] sm:$0xf]
      %v477 = vld [vmem:[%s3 + $0x18] sm:$0xf]
      %v478 = vld [vmem:[%s3 + $0x1c] sm:$0xf]
      %v479 = vld [vmem:[%s3 + $0x20] sm:$0xf]
      %v480 = vld [vmem:[%s3 + $0x24] sm:$0xf]
      %v481 = vld [vmem:[%s3 + $0x28] sm:$0xf]
      %v482 = vld [vmem:[%s3 + $0x2c] sm:$0xf]
      %v483 = vld [vmem:[%s3 + $0x30] sm:$0xf]
      %v484 = vld [vmem:[%s3 + $0x34] sm:$0xf]
      %v485 = vld [vmem:[%s3 + $0x38] sm:$0xf]
      %v486 = vld [vmem:[%s3 + $0x3c] sm:$0xf]
      %v487 = vld [vmem:[%s3 + $0x40] sm:$0xf]
      %v488 = vld [vmem:[%s3 + $0x44] sm:$0xf]
      %v489 = vld [vmem:[%s3 + $0x48] sm:$0xf]
      %v490 = vld [vmem:[%s3 + $0x4c] sm:$0xf]
      %v491 = vld [vmem:[%s3 + $0x50] sm:$0xf]
      %v492 = vld [vmem:[%s3 + $0x54] sm:$0xf]
      %v493 = vld [vmem:[%s3 + $0x58] sm:$0xf]
      %v494 = vld [vmem:[%s3 + $0x5c] sm:$0xf]
      %v495 = vld [vmem:[%s3 + $0x60] sm:$0xf]
      %v496 = vld [vmem:[%s3 + $0x64] sm:$0xf]
      %v497 = vld [vmem:[%s3 + $0x68] sm:$0xf]
      %v498 = vld [vmem:[%s3 + $0x6c] sm:$0xf]
      %v499 = vld [vmem:[%s3 + $0x70] sm:$0xf]
      %v500 = vld [vmem:[%s3 + $0x74] sm:$0xf]
      %v501 = vld [vmem:[%s3 + $0x78] sm:$0xf]
      %v502 = vld [vmem:[%s3 + $0x7c] sm:$0xf]
      %v503 = vld [vmem:[%s4] sm:$0x1]
      %v505 = vlaneseq
      %v506 = vshrl.u32 %v505, 7
      %v507 = vsub.s32 0, %v506
      %v508 = vrot.slane %v503, %v507
      %v542 = vunpack.c.l.b16 %v471
      %v543 = vunpack.c.l.b16 %v472
      %v544 = vunpack.c.l.b16 %v473
      %v545 = vunpack.c.l.b16 %v474
      %v546 = vunpack.c.l.b16 %v475
      %v547 = vunpack.c.l.b16 %v476
      %v548 = vunpack.c.l.b16 %v477
      %v549 = vunpack.c.l.b16 %v478
      %v550 = vunpack.c.l.b16 %v479
      %v551 = vunpack.c.l.b16 %v480
      %v552 = vunpack.c.l.b16 %v481
      %v553 = vunpack.c.l.b16 %v482
      %v554 = vunpack.c.l.b16 %v483
      %v555 = vunpack.c.l.b16 %v484
      %v556 = vunpack.c.l.b16 %v485
      %v557 = vunpack.c.l.b16 %v486
      %v558 = vunpack.c.l.b16 %v487
      %v559 = vunpack.c.l.b16 %v488
      %v560 = vunpack.c.l.b16 %v489
      %v561 = vunpack.c.l.b16 %v490
      %v562 = vunpack.c.l.b16 %v491
      %v563 = vunpack.c.l.b16 %v492
      %v564 = vunpack.c.l.b16 %v493
      %v565 = vunpack.c.l.b16 %v494
      %v566 = vunpack.c.l.b16 %v495
      %v567 = vunpack.c.l.b16 %v496
      %v568 = vunpack.c.l.b16 %v497
      %v569 = vunpack.c.l.b16 %v498
      %v570 = vunpack.c.l.b16 %v499
      %v571 = vunpack.c.l.b16 %v500
      %v572 = vunpack.c.l.b16 %v501
      %v573 = vunpack.c.l.b16 %v502
      %v574 = vpack.c.b16 %v543, %v542
      %v575 = vpack.c.b16 %v545, %v544
      %v576 = vpack.c.b16 %v547, %v546
      %v577 = vpack.c.b16 %v549, %v548
      %v578 = vpack.c.b16 %v551, %v550
      %v579 = vpack.c.b16 %v553, %v552
      %v580 = vpack.c.b16 %v555, %v554
      %v581 = vpack.c.b16 %v557, %v556
      %v582 = vpack.c.b16 %v559, %v558
      %v583 = vpack.c.b16 %v561, %v560
      %v584 = vpack.c.b16 %v563, %v562
      %v585 = vpack.c.b16 %v565, %v564
      %v586 = vpack.c.b16 %v567, %v566
      %v587 = vpack.c.b16 %v569, %v568
      %v588 = vpack.c.b16 %v571, %v570
      %v589 = vpack.c.b16 %v573, %v572
      %606 = vmatprep.subr.bf16.mxu0 0
      %607 = vmatpush1.bf16.msra.mxu0 %v574
      %608 = vmatprep.subr.bf16.mxu0 0
      %609 = vmatpush1.bf16.msra.mxu0 %v575
      %610 = vmatprep.subr.bf16.mxu0 0
      %611 = vmatpush1.bf16.msra.mxu0 %v576
      %612 = vmatprep.subr.bf16.mxu0 0
      %613 = vmatpush1.bf16.msra.mxu0 %v577
      %614 = vmatprep.subr.bf16.mxu0 0
      %615 = vmatpush1.bf16.msra.mxu0 %v578
      %616 = vmatprep.subr.bf16.mxu0 0
      %617 = vmatpush1.bf16.msra.mxu0 %v579
      %618 = vmatprep.subr.bf16.mxu0 0
      %619 = vmatpush1.bf16.msra.mxu0 %v580
      %620 = vmatprep.subr.bf16.mxu0 0
      %621 = vmatpush1.bf16.msra.mxu0 %v581
      %622 = vmatprep.subr.bf16.mxu0 0
      %623 = vmatpush1.bf16.msra.mxu0 %v582
      %624 = vmatprep.subr.bf16.mxu0 0
      %625 = vmatpush1.bf16.msra.mxu0 %v583
      %626 = vmatprep.subr.bf16.mxu0 0
      %627 = vmatpush1.bf16.msra.mxu0 %v584
      %628 = vmatprep.subr.bf16.mxu0 0
      %629 = vmatpush1.bf16.msra.mxu0 %v585
      %630 = vmatprep.subr.bf16.mxu0 0
      %631 = vmatpush1.bf16.msra.mxu0 %v586
      %632 = vmatprep.subr.bf16.mxu0 0
      %633 = vmatpush1.bf16.msra.mxu0 %v587
      %634 = vmatprep.subr.bf16.mxu0 0
      %635 = vmatpush1.bf16.msra.mxu0 %v588
      %636 = vmatprep.subr.bf16.mxu0 0
      %637 = vmatpush1.bf16.msra.mxu0 %v589
      %638 = vmatprep.mubr.bf16.mxu0 %v470
      %639 = vmatmul.mubr.bf16.gmra.mrb[0].mxu0 %v469
      %v640 = vpop.f32.mrb[0].mxu0
      %v641 = vadd.f32 %v508, %v640
      %v642 = vpop.f32.mrb[0].mxu0
      %v643 = vpop.f32.mrb[0].mxu0
      %v644 = vadd.f32 %v508, %v643
      %v645 = vpop.f32.mrb[0].mxu0
      %646 = vdwg.mxu0
      %v647 = vmax.f32 %v641, 0.0
      %v648 = vmax.f32 %v644, 0.0
      %v649 = vpack.c.bf16 %v648, %v647
      %v650 = vld [vmem:[%s5] sm:$0xf]
      %v651 = vld [vmem:[%s5 + $0x4] sm:$0xf]
      %v652 = vld [vmem:[%s5 + $0x8] sm:$0xf]
      %v653 = vld [vmem:[%s5 + $0xc] sm:$0xf]
      %v654 = vld [vmem:[%s5 + $0x10] sm:$0xf]
      %v655 = vld [vmem:[%s5 + $0x14] sm:$0xf]
      %v656 = vld [vmem:[%s5 + $0x18] sm:$0xf]
      %v657 = vld [vmem:[%s5 + $0x1c] sm:$0xf]
      %v658 = vld [vmem:[%s5 + $0x20] sm:$0xf]
      %v659 = vld [vmem:[%s5 + $0x24] sm:$0xf]
      %v660 = vld [vmem:[%s5 + $0x28] sm:$0xf]
      %v661 = vld [vmem:[%s5 + $0x2c] sm:$0xf]
      %v662 = vld [vmem:[%s5 + $0x30] sm:$0xf]
      %v663 = vld [vmem:[%s5 + $0x34] sm:$0xf]
      %v664 = vld [vmem:[%s5 + $0x38] sm:$0xf]
      %v665 = vld [vmem:[%s5 + $0x3c] sm:$0xf]
      %v666 = vld [vmem:[%s6] sm:$0x1]
      %v668 = vlaneseq
      %v669 = vshrl.u32 %v668, 7
      %v670 = vsub.s32 0, %v669
      %v671 = vrot.slane %v666, %v670
      %v689 = vunpack.c.l.b16 %v650
      %v690 = vunpack.c.l.b16 %v651
      %v691 = vunpack.c.l.b16 %v652
      %v692 = vunpack.c.l.b16 %v653
      %v693 = vunpack.c.l.b16 %v654
      %v694 = vunpack.c.l.b16 %v655
      %v695 = vunpack.c.l.b16 %v656
      %v696 = vunpack.c.l.b16 %v657
      %v697 = vunpack.c.l.b16 %v658
      %v698 = vunpack.c.l.b16 %v659
      %v699 = vunpack.c.l.b16 %v660
      %v700 = vunpack.c.l.b16 %v661
      %v701 = vunpack.c.l.b16 %v662
      %v702 = vunpack.c.l.b16 %v663
      %v703 = vunpack.c.l.b16 %v664
      %v704 = vunpack.c.l.b16 %v665
      %v705 = vpack.c.b16 %v690, %v689
      %v706 = vpack.c.b16 %v692, %v691
      %v707 = vpack.c.b16 %v694, %v693
      %v708 = vpack.c.b16 %v696, %v695
      %v709 = vpack.c.b16 %v698, %v697
      %v710 = vpack.c.b16 %v700, %v699
      %v711 = vpack.c.b16 %v702, %v701
      %v712 = vpack.c.b16 %v704, %v703
      %721 = vmatprep.subr.bf16.mxu0 0
      %722 = vmatpush1.bf16.msra.mxu0 %v705
      %723 = vmatprep.subr.bf16.mxu0 0
      %724 = vmatpush1.bf16.msra.mxu0 %v706
      %725 = vmatprep.subr.bf16.mxu0 0
      %726 = vmatpush1.bf16.msra.mxu0 %v707
      %727 = vmatprep.subr.bf16.mxu0 0
      %728 = vmatpush1.bf16.msra.mxu0 %v708
      %729 = vmatprep.subr.bf16.mxu0 0
      %730 = vmatpush1.bf16.msra.mxu0 %v709
      %731 = vmatprep.subr.bf16.mxu0 0
      %732 = vmatpush1.bf16.msra.mxu0 %v710
      %733 = vmatprep.subr.bf16.mxu0 0
      %734 = vmatpush1.bf16.msra.mxu0 %v711
      %735 = vmatprep.subr.bf16.mxu0 0
      %736 = vmatpush1.bf16.msra.mxu0 %v712
      %737 = vmatprep.subr.bf16.mxu0 0
      %738 = vmatpush1.bf16.msra.mxu0 0
      %739 = vmatprep.subr.bf16.mxu0 0
      %740 = vmatpush1.bf16.msra.mxu0 0
      %741 = vmatprep.subr.bf16.mxu0 0
      %742 = vmatpush1.bf16.msra.mxu0 0
      %743 = vmatprep.subr.bf16.mxu0 0
      %744 = vmatpush1.bf16.msra.mxu0 0
      %745 = vmatprep.subr.bf16.mxu0 0
      %746 = vmatpush1.bf16.msra.mxu0 0
      %747 = vmatprep.subr.bf16.mxu0 0
      %748 = vmatpush1.bf16.msra.mxu0 0
      %749 = vmatprep.subr.bf16.mxu0 0
      %750 = vmatpush1.bf16.msra.mxu0 0
      %751 = vmatprep.subr.bf16.mxu0 0
      %752 = vmatpush1.bf16.msra.mxu0 0
      %753 = vmatprep.mubr.bf16.mxu0 0
      %754 = vmatmul.mubr.bf16.gmra.mrb[0].mxu0 %v649
      %v755 = vpop.f32.mrb[0].mxu0
      %v756 = vadd.f32 %v671, %v755
      %v757 = vpop.f32.mrb[0].mxu0
      %v758 = vpop.f32.mrb[0].mxu0
      %v759 = vadd.f32 %v671, %v758
      %v760 = vpop.f32.mrb[0].mxu0
      %761 = vdwg.mxu0
      %v762 = vmax.f32 %v756, 0.0
      %v763 = vmax.f32 %v759, 0.0
      %v764 = vpack.c.bf16 %v763, %v762
      %v765 = vld [vmem:[%s7] sm:$0xf]
      %v766 = vld [vmem:[%s7 + $0x4] sm:$0xf]
      %v767 = vld [vmem:[%s7 + $0x8] sm:$0xf]
      %v768 = vld [vmem:[%s7 + $0xc] sm:$0xf]
      %v769 = vld [vmem:[%s7 + $0x10] sm:$0xf]
      %v770 = vld [vmem:[%s7 + $0x14] sm:$0xf]
      %v771 = vld [vmem:[%s7 + $0x18] sm:$0xf]
      %v772 = vld [vmem:[%s7 + $0x1c] sm:$0xf]
      %v773 = vld [vmem:[%s8] sm:$0x1]
      %v775 = vlaneseq
      %v776 = vshrl.u32 %v775, 7
      %v777 = vsub.s32 0, %v776
      %v778 = vrot.slane %v773, %v777
      %v788 = vunpack.c.l.b16 %v765
      %v789 = vunpack.c.l.b16 %v766
      %v790 = vunpack.c.l.b16 %v767
      %v791 = vunpack.c.l.b16 %v768
      %v792 = vunpack.c.l.b16 %v769
      %v793 = vunpack.c.l.b16 %v770
      %v794 = vunpack.c.l.b16 %v771
      %v795 = vunpack.c.l.b16 %v772
      %v796 = vpack.c.b16 %v789, %v788
      %v797 = vpack.c.b16 %v791, %v790
      %v798 = vpack.c.b16 %v793, %v792
      %v799 = vpack.c.b16 %v795, %v794
      %vm804 = vcmask 523264
      %v806 = vsel %vm804, %v764, 0
      %808 = vmatprep.subr.bf16.mxu0 0
      %809 = vmatpush1.bf16.msra.mxu0 %v796
      %810 = vmatprep.subr.bf16.mxu0 0
      %811 = vmatpush1.bf16.msra.mxu0 %v797
      %812 = vmatprep.subr.bf16.mxu0 0
      %813 = vmatpush1.bf16.msra.mxu0 %v798
      %814 = vmatprep.subr.bf16.mxu0 0
      %815 = vmatpush1.bf16.msra.mxu0 %v799
      %816 = vmatprep.subr.bf16.mxu0 0
      %817 = vmatpush1.bf16.msra.mxu0 0
      %818 = vmatprep.subr.bf16.mxu0 0
      %819 = vmatpush1.bf16.msra.mxu0 0
      %820 = vmatprep.subr.bf16.mxu0 0
      %821 = vmatpush1.bf16.msra.mxu0 0
      %822 = vmatprep.subr.bf16.mxu0 0
      %823 = vmatpush1.bf16.msra.mxu0 0
      %824 = vmatprep.subr.bf16.mxu0 0
      %825 = vmatpush1.bf16.msra.mxu0 0
      %826 = vmatprep.subr.bf16.mxu0 0
      %827 = vmatpush1.bf16.msra.mxu0 0
      %828 = vmatprep.subr.bf16.mxu0 0
      %829 = vmatpush1.bf16.msra.mxu0 0
      %830 = vmatprep.subr.bf16.mxu0 0
      %831 = vmatpush1.bf16.msra.mxu0 0
      %832 = vmatprep.subr.bf16.mxu0 0
      %833 = vmatpush1.bf16.msra.mxu0 0
      %834 = vmatprep.subr.bf16.mxu0 0
      %835 = vmatpush1.bf16.msra.mxu0 0
      %836 = vmatprep.subr.bf16.mxu0 0
      %837 = vmatpush1.bf16.msra.mxu0 0
      %838 = vmatprep.subr.bf16.mxu0 0
      %839 = vmatpush1.bf16.msra.mxu0 0
      %840 = vmatprep.mubr.bf16.mxu0 0
      %841 = vmatmul.mubr.bf16.gmra.mrb[0].mxu0 %v806
      %v842 = vpop.f32.mrb[0].mxu0
      %v843 = vadd.f32 %v778, %v842
      %v844 = vpop.f32.mrb[0].mxu0
      %v845 = vpop.f32.mrb[0].mxu0
      %v846 = vadd.f32 %v778, %v845
      %v847 = vpop.f32.mrb[0].mxu0
      %848 = vdwg.mxu0
      %v849 = vmax.f32 %v843, 0.0
      %v850 = vmax.f32 %v846, 0.0
      %v851 = vpack.c.bf16 %v850, %v849
      %v852 = vld [vmem:[%s9] sm:$0xf]
      %v853 = vld [vmem:[%s9 + $0x4] sm:$0xf]
      %v854 = vld [vmem:[%s9 + $0x8] sm:$0xf]
      %v855 = vld [vmem:[%s9 + $0xc] sm:$0xf]
      %v856 = vld [vmem:[%s10] sm:$0x1]
      %v858 = vlaneseq
      %v859 = vshrl.u32 %v858, 7
      %v860 = vsub.s32 0, %v859
      %v861 = vrot.slane %v856, %v860
      %v867 = vunpack.c.l.b16 %v852
      %v868 = vunpack.c.l.b16 %v853
      %v869 = vunpack.c.l.b16 %v854
      %v870 = vunpack.c.l.b16 %v855
      %v871 = vpack.c.b16 %v868, %v867
      %v872 = vpack.c.b16 %v870, %v869
      %vm875 = vcmask 261120
      %v877 = vsel %vm875, %v851, 0
      %879 = vmatprep.subr.bf16.mxu0 0
      %880 = vmatpush1.bf16.msra.mxu0 %v871
      %881 = vmatprep.subr.bf16.mxu0 0
      %882 = vmatpush1.bf16.msra.mxu0 %v872
      %883 = vmatprep.subr.bf16.mxu0 0
      %884 = vmatpush1.bf16.msra.mxu0 0
      %885 = vmatprep.subr.bf16.mxu0 0
      %886 = vmatpush1.bf16.msra.mxu0 0
      %887 = vmatprep.subr.bf16.mxu0 0
      %888 = vmatpush1.bf16.msra.mxu0 0
      %889 = vmatprep.subr.bf16.mxu0 0
      %890 = vmatpush1.bf16.msra.mxu0 0
      %891 = vmatprep.subr.bf16.mxu0 0
      %892 = vmatpush1.bf16.msra.mxu0 0
      %893 = vmatprep.subr.bf16.mxu0 0
      %894 = vmatpush1.bf16.msra.mxu0 0
      %895 = vmatprep.subr.bf16.mxu0 0
      %896 = vmatpush1.bf16.msra.mxu0 0
      %897 = vmatprep.subr.bf16.mxu0 0
      %898 = vmatpush1.bf16.msra.mxu0 0
      %899 = vmatprep.subr.bf16.mxu0 0
      %900 = vmatpush1.bf16.msra.mxu0 0
      %901 = vmatprep.subr.bf16.mxu0 0
      %902 = vmatpush1.bf16.msra.mxu0 0
      %903 = vmatprep.subr.bf16.mxu0 0
      %904 = vmatpush1.bf16.msra.mxu0 0
      %905 = vmatprep.subr.bf16.mxu0 0
      %906 = vmatpush1.bf16.msra.mxu0 0
      %907 = vmatprep.subr.bf16.mxu0 0
      %908 = vmatpush1.bf16.msra.mxu0 0
      %909 = vmatprep.subr.bf16.mxu0 0
      %910 = vmatpush1.bf16.msra.mxu0 0
      %911 = vmatprep.mubr.bf16.mxu0 0
      %912 = vmatmul.mubr.bf16.gmra.mrb[0].mxu0 %v877
      %v913 = vpop.f32.mrb[0].mxu0
      %v914 = vadd.f32 %v861, %v913
      %v915 = vpop.f32.mrb[0].mxu0
      %v916 = vpop.f32.mrb[0].mxu0
      %v917 = vadd.f32 %v861, %v916
      %v918 = vpop.f32.mrb[0].mxu0
      %919 = vdwg.mxu0
      %v920 = vmul.f32 %v914, 5.0
      %v921 = vmul.f32 %v917, 5.0
      %v922 = vxor.u32 %v920, 2147483648
      %v923 = vxor.u32 %v921, 2147483648
      %v924 = vmul.f32 %v922, 1.442695
      %v925 = vpow.pop %v924
      %v926 = vmul.f32 %v923, 1.442695
      %v927 = vpow.pop %v926
      %v928 = vadd.f32 %v925, 1.0
      %v929 = vadd.f32 %v927, 1.0
      %v930 = vrcp.pop %v928
      %v931 = vmul.f32 1.0, %v930
      %v932 = vrcp.pop %v929
      %v933 = vmul.f32 1.0, %v932
      %934 = vst [vmem:[%s388] sm:$0xff] %v931
      %935 = vst [vmem:[%s388 + $0x8] sm:$0xff] %v933
      %s936 = smul.u32 2, %s22
      %p937 = scmp.lt.s32.totalorder %s936, 7
      %s938 = scalar_select %p937, %s936, 7
      %s939 = smul.addr %s938, 8
      %s940 = scalar_lea.vmem %s11, %s939
      // Predicated region
      $region65: #{ueca_forward.1} parent=63 // pred_check
        %p941 = pneg %p276
      $region66: #{ueca_forward.1} parent=63 // pred_check_branch
        %943 = sbr.rel (%p941) target = $region68
      $region67: #{ueca_forward.1} parent=63 // pred_region
        %s944 = smul.u32 2, %s22
      $region68: #{ueca_forward.1} parent=63 // pred_fallthru
        _
    $region64: #{ueca_forward.1} parent=5 // pred_fallthru
      _
    %p945 = scmp.le.s32.totalorder 2, %s17
    // Predicated region
    $region69: #{ueca_forward.1} parent=5 // pred_check
      %p946 = pneg %p945
    $region70: #{ueca_forward.1} parent=5 // pred_check_branch
      %948 = sbr.rel (%p946) target = $region72
    $region71: #{ueca_forward.1} parent=5 // pred_region
      %s949 = ssub.s32 %s17, 2
      // Predicated region
      $region73: #{ueca_forward.1} parent=71 // pred_check
        %p950 = pneg %p282
      $region74: #{ueca_forward.1} parent=71 // pred_check_branch
        %952 = sbr.rel (%p950) target = $region76
      $region75: #{ueca_forward.1} parent=71 // pred_region
        %s953 = smul.u32 2, %s23
        %p954 = scmp.lt.s32.totalorder %s953, 7
        %s955 = scalar_select %p954, %s953, 7
        %s956 = smul.addr %s955, 8
        %s957 = scalar_lea.vmem %s11, %s956
      $region76: #{ueca_forward.1} parent=71 // pred_fallthru
        _
    $region72: #{ueca_forward.1} parent=5 // pred_fallthru
      _
  $region6: #{ueca_forward.1} parent=0 // loop_footer
    %s21 = sadd.s32 1, %s17
  $region7: #{ueca_forward.1} parent=0 // loop_footer_branch
    %16 = sbr.rel target = $region3
  $region8: #{ueca_forward.1} parent=0 // loop_exit
    _

</llo_original>
